<compile_context>
chip_gen: v6e
topology: v6e:2x2x1
jax: 0.10.0
libtpu: 0.0.40
codegen_flags: <defaults>
</compile_context>

<pallas_src>
import functools

import jax
import jax.numpy as jnp
from jax.experimental import pallas as pl
from jax.experimental.pallas import tpu as pltpu


# ----------------------------------------------------------------------------
# Pallas kernel: fused (multi-modality) LSTM recurrence, final hidden state.
# ----------------------------------------------------------------------------
def _fused_lstm_kernel(x_ref, wih_ref, whh_ref, b_ref, hN_ref, xz_ref, *,
                       hidden_total):
    """Fused single-layer LSTM (zero initial state), emits final hidden state.

    x_ref   : (S, TN, F)  time-major inputs                  (VMEM)
    wih_ref : (F, 4H)     fused input->gates weights         (VMEM)
    whh_ref : (H, 4H)     fused hidden->gates weights        (VMEM)
    b_ref   : (1, 4H)     fused combined bias (b_ih + b_hh)  (VMEM)
    hN_ref  : (TN, H)     output: final hidden state         (VMEM)
    xz_ref  : (S, TN, 4H) scratch: hoisted input projection  (VMEM)
    """
    S, TN, F = x_ref.shape
    H = hidden_total
    G = 4 * H

    # --- Hoisted input projection: one big MXU matmul + single bias add. ---
    # (S, TN, F) -> (S*TN, F) merges leading sublane-aligned dims (TN % 8 == 0
    # or TN == N), so this reshape does not cross lane tiles.
    x_all = x_ref[...].reshape(S * TN, F)
    xz_ref[...] = (
        jnp.dot(x_all, wih_ref[...], preferred_element_type=jnp.float32)
        + b_ref[...]
    ).reshape(S, TN, G)

    whh = whh_ref[...]

    def gates(z, c_prev):
        # Lane-dense activations: 2 full-vreg EUP passes instead of 4 masked
        # sub-slice passes; slicing happens only for the cheap VPU combine.
        sig = jax.nn.sigmoid(z)
        tnh = jnp.tanh(z)
        i_g = sig[:, 0 * H:1 * H]
        f_g = sig[:, 1 * H:2 * H]
        g_g = tnh[:, 2 * H:3 * H]
        o_g = sig[:, 3 * H:4 * H]
        c_new = f_g * c_prev + i_g * g_g
        h_new = o_g * jnp.tanh(c_new)
        return h_new, c_new

    # --- Step 0: h0 == c0 == 0, so skip the recurrent matmul entirely. ---
    c0 = jnp.zeros((TN, H), jnp.float32)
    h1, c1 = gates(xz_ref[0], c0)

    # --- Serial recurrence for t = 1..S-1: only h @ W_hh + gate math. ---
    def step(t, carry):
        h, c = carry
        z = xz_ref[t] + jnp.dot(h, whh, preferred_element_type=jnp.float32)
        return gates(z, c)

    h_final, _ = jax.lax.fori_loop(1, S, step, (h1, c1), unroll=True)
    hN_ref[...] = h_final


def fused_lstm_final_hidden(x_tm, w_ih, w_hh, b):
    """Run the fused Pallas LSTM kernel.

    x_tm : (S, N, F) time-major f32 input (all modality features concatenated)
    w_ih : (F, 4H)   fused input->gate weights
    w_hh : (H, 4H)   fused hidden->gate weights
    b    : (1, 4H)   fused bias
    returns final hidden state (N, H) f32.
    """
    S, N, F = x_tm.shape
    G = w_ih.shape[1]
    H = G // 4

    # Batch tile: single resident block for small N; stream tiles otherwise.
    TN = N
    for cand in (512, 256, 128, 64, 32, 16, 8):
        if N > cand and N % cand == 0:
            TN = cand
            break
    grid = (N // TN,)

    kernel = functools.partial(_fused_lstm_kernel, hidden_total=H)

    return pl.pallas_call(
        kernel,
        out_shape=jax.ShapeDtypeStruct((N, H), jnp.float32),
        grid_spec=pltpu.PrefetchScalarGridSpec(
            num_scalar_prefetch=0,
            grid=grid,
            in_specs=[
                pl.BlockSpec((S, TN, F), lambda i: (0, i, 0)),
                pl.BlockSpec((F, G), lambda i: (0, 0)),
                pl.BlockSpec((H, G), lambda i: (0, 0)),
                pl.BlockSpec((1, G), lambda i: (0, 0)),
            ],
            out_specs=pl.BlockSpec((TN, H), lambda i: (i, 0)),
            scratch_shapes=[pltpu.VMEM((S, TN, G), jnp.float32)],
        ),
        compiler_params=pltpu.CompilerParams(
            # Independent batch tiles -> megacore sharding on v7x.
            dimension_semantics=("parallel",),
        ),
    )(x_tm, w_ih, w_hh, b)


# ----------------------------------------------------------------------------
# Parameter preparation (done ONCE): per-modality PyTorch-layout LSTM params
# -> fused block-diagonal weights in gate-group-major order.
# ----------------------------------------------------------------------------
def init_lstm_params(key, in_dim, hidden):
    """Deterministic init mirroring nn.LSTM's uniform(-1/sqrt(H), 1/sqrt(H))."""
    k1, k2, k3, k4 = jax.random.split(key, 4)
    bound = 1.0 / jnp.sqrt(jnp.float32(hidden))
    w_ih = jax.random.uniform(k1, (4 * hidden, in_dim), jnp.float32, -bound, bound)
    w_hh = jax.random.uniform(k2, (4 * hidden, hidden), jnp.float32, -bound, bound)
    b_ih = jax.random.uniform(k3, (4 * hidden,), jnp.float32, -bound, bound)
    b_hh = jax.random.uniform(k4, (4 * hidden,), jnp.float32, -bound, bound)
    return dict(w_ih=w_ih, w_hh=w_hh, b_ih=b_ih, b_hh=b_hh)


def build_fused_lstm_params(mod_params, config):
    """Assemble the fused block-diagonal weights.

    Gate layout: [i_t i_a i_v | f_t f_a f_v | g_t g_a g_v | o_t o_a o_v],
    matching PyTorch nn.LSTM per-modality gate ordering [i, f, g, o].
    Disabled modalities get a zeroed W_ih block (== zeroed context in PyTorch);
    their recurrent weights / biases stay active so h_N matches exactly.
    """
    order = ("t", "a", "v")
    in_dims = [config[f"uni_{m}_in_dim"] for m in order]
    hid_dims = [config[f"uni_{m}_n_hidden"] for m in order]
    use = [config[f"use_{m}_context"] for m in order]

    F = sum(in_dims)
    H = sum(hid_dims)
    G = 4 * H

    w_ih = jnp.zeros((F, G), jnp.float32)
    w_hh = jnp.zeros((H, G), jnp.float32)
    bias = jnp.zeros((1, G), jnp.float32)

    f_off = 0
    h_off = 0
    for m, D, Hm, enabled in zip(order, in_dims, hid_dims, use):
        p = mod_params[m]
        for k in range(4):  # gate groups i, f, g, o
            col0 = k * H + h_off
            if enabled:
                w_ih = w_ih.at[f_off:f_off + D, col0:col0 + Hm].set(
                    jnp.transpose(p["w_ih"][k * Hm:(k + 1) * Hm, :]))
            w_hh = w_hh.at[h_off:h_off + Hm, col0:col0 + Hm].set(
                jnp.transpose(p["w_hh"][k * Hm:(k + 1) * Hm, :]))
            bias = bias.at[0, col0:col0 + Hm].set(
                p["b_ih"][k * Hm:(k + 1) * Hm] + p["b_hh"][k * Hm:(k + 1) * Hm])
        f_off += D
        h_off += Hm

    return dict(w_ih=w_ih, w_hh=w_hh, b=bias, hid_dims=tuple(hid_dims))


# ----------------------------------------------------------------------------
# UnimodalContextNet forward (glue) + fused Pallas LSTM (hot path).
# ----------------------------------------------------------------------------
def unimodal_context_net_forward(x_c, fused):
    """x_c: (old_batch, context_len, seq_len, num_feats) float32.

    Returns (t_result, a_result, v_result), each (old_batch, context_len, H_m).
    """
    old_b, ctx_len, seq_len, num_feats = x_c.shape
    new_b = old_b * ctx_len

    x = jnp.reshape(x_c, (new_b, seq_len, num_feats))
    x_tm = jnp.transpose(x, (1, 0, 2)).astype(jnp.float32)      # (S, N, F)

    hN = fused_lstm_final_hidden(x_tm, fused["w_ih"], fused["w_hh"], fused["b"])

    Ht, Ha, Hv = fused["hid_dims"]
    t_result = jnp.reshape(hN[:, :Ht], (old_b, ctx_len, Ht))
    a_result = jnp.reshape(hN[:, Ht:Ht + Ha], (old_b, ctx_len, Ha))
    v_result = jnp.reshape(hN[:, Ht + Ha:], (old_b, ctx_len, Hv))
    return t_result, a_result, v_result


# ----------------------------------------------------------------------------
# Pure-JAX reference (PyTorch nn.LSTM semantics) for verification.
# ----------------------------------------------------------------------------
def _ref_lstm_final_hidden(x_bsd, w_ih, w_hh, b_ih, b_hh):
    N, S, D = x_bsd.shape
    H = w_hh.shape[1]

    def step(carry, x_t):
        h, c = carry
        z = x_t @ w_ih.T + h @ w_hh.T + b_ih + b_hh
        i = jax.nn.sigmoid(z[:, :H])
        f = jax.nn.sigmoid(z[:, H:2 * H])
        g = jnp.tanh(z[:, 2 * H:3 * H])
        o = jax.nn.sigmoid(z[:, 3 * H:])
        c = f * c + i * g
        h = o * jnp.tanh(c)
        return (h, c), None

    init = (jnp.zeros((N, H), jnp.float32), jnp.zeros((N, H), jnp.float32))
    (h_final, _), _ = jax.lax.scan(step, init, jnp.transpose(x_bsd, (1, 0, 2)))
    return h_final


if __name__ == "__main__":
    config = {
        "uni_t_in_dim": 8,
        "uni_a_in_dim": 4,
        "uni_v_in_dim": 4,
        "uni_t_n_hidden": 16,
        "uni_a_n_hidden": 8,
        "uni_v_n_hidden": 8,
        "use_t_context": True,
        "use_a_context": True,
        "use_v_context": True,
    }

    old_batch, context_len, seq_len = 2, 4, 8
    num_feats = (
        config["uni_t_in_dim"] + config["uni_a_in_dim"] + config["uni_v_in_dim"]
    )

    root = jax.random.PRNGKey(0)
    k_x, k_t, k_a, k_v = jax.random.split(root, 4)

    mod_params = {
        "t": init_lstm_params(k_t, config["uni_t_in_dim"], config["uni_t_n_hidden"]),
        "a": init_lstm_params(k_a, config["uni_a_in_dim"], config["uni_a_n_hidden"]),
        "v": init_lstm_params(k_v, config["uni_v_in_dim"], config["uni_v_n_hidden"]),
    }

    # One-time fused parameter prep (transposes, bias fusion, block-diag).
    fused = build_fused_lstm_params(mod_params, config)

    x_c = jax.random.normal(
        k_x, (old_batch, context_len, seq_len, num_feats), jnp.float32
    )

    fwd = jax.jit(lambda xc: unimodal_context_net_forward(xc, fused))
    t_res, a_res, v_res = fwd(x_c)
    jax.block_until_ready((t_res, a_res, v_res))

    assert t_res.shape == (old_batch, context_len, config["uni_t_n_hidden"])
    assert a_res.shape == (old_batch, context_len, config["uni_a_n_hidden"])
    assert v_res.shape == (old_batch, context_len, config["uni_v_n_hidden"])

    # --- Verify against a pure-JAX per-modality reference (PyTorch semantics).
    new_b = old_batch * context_len
    x_flat = jnp.reshape(x_c, (new_b, seq_len, num_feats))
    td, ad = config["uni_t_in_dim"], config["uni_a_in_dim"]
    t_ctx = x_flat[:, :, :td]
    a_ctx = x_flat[:, :, td:td + ad]
    v_ctx = x_flat[:, :, td + ad:]
    if not config["use_t_context"]:
        t_ctx = jnp.zeros_like(t_ctx)
    if not config["use_a_context"]:
        a_ctx = jnp.zeros_like(a_ctx)
    if not config["use_v_context"]:
        v_ctx = jnp.zeros_like(v_ctx)
    refs = (
        _ref_lstm_final_hidden(t_ctx, **mod_params["t"]),
        _ref_lstm_final_hidden(a_ctx, **mod_params["a"]),
        _ref_lstm_final_hidden(v_ctx, **mod_params["v"]),
    )
    outs = (
        jnp.reshape(t_res, (new_b, -1)),
        jnp.reshape(a_res, (new_b, -1)),
        jnp.reshape(v_res, (new_b, -1)),
    )
    for got, want in zip(outs, refs):
        assert jnp.allclose(got, want, rtol=1e-4, atol=1e-4), (
            float(jnp.max(jnp.abs(got - want)))
        )

    print("KERNEL_OK")
</pallas_src>

<mosaic_0001>
module attributes {stable_mosaic.version = 11 : i64} {
  func.func @_fused_lstm_kernel(%arg0: i32, %arg1: memref<8x8x16xf32, #tpu.memory_space<vmem>>, %arg2: memref<16x128xf32, #tpu.memory_space<vmem>>, %arg3: memref<32x128xf32, #tpu.memory_space<vmem>>, %arg4: memref<1x128xf32, #tpu.memory_space<vmem>>, %arg5: memref<8x32xf32, #tpu.memory_space<vmem>>, %arg6: memref<8x8x128xf32, #tpu.memory_space<vmem>>) attributes {dimension_semantics = [#tpu.dimension_semantics<parallel>], iteration_bounds = array<i64: 1>, scalar_prefetch = 0 : i64, scratch_operands = 1 : i64, tpu.core_type = #tpu.core_type<tc>, window_params = [{transform_indices = @transform_0, window_bounds = array<i64: 8, 8, 16>}, {pipeline_mode = #tpu.pipeline_mode<synchronous>, transform_indices = @transform_1, window_bounds = array<i64: 16, 128>}, {pipeline_mode = #tpu.pipeline_mode<synchronous>, transform_indices = @transform_2, window_bounds = array<i64: 32, 128>}, {pipeline_mode = #tpu.pipeline_mode<synchronous>, transform_indices = @transform_3, window_bounds = array<i64: 1, 128>}, {transform_indices = @transform_4, window_bounds = array<i64: 8, 32>}]} {
    %c0 = arith.constant 0 : index
    %c0_0 = arith.constant 0 : index
    %c0_1 = arith.constant 0 : index
    %0 = vector.load %arg1[%c0, %c0_0, %c0_1] : memref<8x8x16xf32, #tpu.memory_space<vmem>>, vector<8x8x16xf32>
    %1 = vector.shape_cast %0 : vector<8x8x16xf32> to vector<64x16xf32>
    %c0_2 = arith.constant 0 : index
    %c0_3 = arith.constant 0 : index
    %2 = vector.load %arg2[%c0_2, %c0_3] : memref<16x128xf32, #tpu.memory_space<vmem>>, vector<16x128xf32>
    %cst = arith.constant dense<0.000000e+00> : vector<64x128xf32>
    %3 = tpu.matmul %1, %2, %cst {dimension_numbers = #tpu.dot_dimension_numbers<[1], [0], [0], [1], [0, 0, 1, 1], [], []>} : vector<64x16xf32>, vector<16x128xf32>, vector<64x128xf32> -> vector<64x128xf32>
    %c0_4 = arith.constant 0 : index
    %c0_5 = arith.constant 0 : index
    %4 = vector.load %arg4[%c0_4, %c0_5] : memref<1x128xf32, #tpu.memory_space<vmem>>, vector<1x128xf32>
    %5 = vector.broadcast %4 : vector<1x128xf32> to vector<64x128xf32>
    %6 = arith.addf %3, %5 : vector<64x128xf32>
    %7 = vector.shape_cast %6 : vector<64x128xf32> to vector<8x8x128xf32>
    %c0_6 = arith.constant 0 : index
    %c0_7 = arith.constant 0 : index
    %c0_8 = arith.constant 0 : index
    %8 = vector.load %arg6[%c0_6, %c0_7, %c0_8] : memref<8x8x128xf32, #tpu.memory_space<vmem>>, vector<8x8x128xf32>
    tpu.vector_store %arg6[%c0_6, %c0_7, %c0_8], %7 {strides = array<i32>} : memref<8x8x128xf32, #tpu.memory_space<vmem>>, vector<8x8x128xf32>,
    %c0_9 = arith.constant 0 : index
    %c0_10 = arith.constant 0 : index
    %9 = vector.load %arg3[%c0_9, %c0_10] : memref<32x128xf32, #tpu.memory_space<vmem>>, vector<32x128xf32>
    %cst_11 = arith.constant 0.000000e+00 : f32
    %10 = vector.broadcast %cst_11 : f32 to vector<8x32xf32>
    %c0_12 = arith.constant 0 : index
    %c0_13 = arith.constant 0 : index
    %c0_14 = arith.constant 0 : index
    %11 = vector.load %arg6[%c0_12, %c0_13, %c0_14] : memref<8x8x128xf32, #tpu.memory_space<vmem>>, vector<1x8x128xf32>
    %12 = vector.shape_cast %11 : vector<1x8x128xf32> to vector<8x128xf32>
    %13 = arith.negf %12 : vector<8x128xf32>
    %14 = math.exp %13 : vector<8x128xf32>
    %cst_15 = arith.constant 1.000000e+00 : f32
    %15 = vector.broadcast %cst_15 : f32 to vector<8x128xf32>
    %16 = arith.addf %15, %14 : vector<8x128xf32>
    %17 = arith.divf %15, %16 : vector<8x128xf32>
    %18 = math.tanh %12 : vector<8x128xf32>
    %19 = vector.extract_strided_slice %17 {offsets = [0, 0], sizes = [8, 32], strides = [1, 1]} : vector<8x128xf32> to vector<8x32xf32>
    %20 = vector.extract_strided_slice %17 {offsets = [0, 32], sizes = [8, 32], strides = [1, 1]} : vector<8x128xf32> to vector<8x32xf32>
    %21 = vector.extract_strided_slice %18 {offsets = [0, 64], sizes = [8, 32], strides = [1, 1]} : vector<8x128xf32> to vector<8x32xf32>
    %22 = vector.extract_strided_slice %17 {offsets = [0, 96], sizes = [8, 32], strides = [1, 1]} : vector<8x128xf32> to vector<8x32xf32>
    %23 = arith.mulf %20, %10 : vector<8x32xf32>
    %24 = arith.mulf %19, %21 : vector<8x32xf32>
    %25 = arith.addf %23, %24 : vector<8x32xf32>
    %26 = math.tanh %25 : vector<8x32xf32>
    %27 = arith.mulf %22, %26 : vector<8x32xf32>
    %c1_i32 = arith.constant 1 : i32
    %28 = arith.index_cast %c1_i32 : i32 to index
    %c0_16 = arith.constant 0 : index
    %c0_17 = arith.constant 0 : index
    %29 = vector.load %arg6[%28, %c0_16, %c0_17] : memref<8x8x128xf32, #tpu.memory_space<vmem>>, vector<1x8x128xf32>
    %30 = vector.shape_cast %29 : vector<1x8x128xf32> to vector<8x128xf32>
    %cst_18 = arith.constant dense<0.000000e+00> : vector<8x128xf32>
    %31 = tpu.matmul %27, %9, %cst_18 {dimension_numbers = #tpu.dot_dimension_numbers<[1], [0], [0], [1], [0, 0, 1, 1], [], []>} : vector<8x32xf32>, vector<32x128xf32>, vector<8x128xf32> -> vector<8x128xf32>
    %32 = arith.addf %30, %31 : vector<8x128xf32>
    %33 = arith.negf %32 : vector<8x128xf32>
    %34 = math.exp %33 : vector<8x128xf32>
    %cst_19 = arith.constant 1.000000e+00 : f32
    %35 = vector.broadcast %cst_19 : f32 to vector<8x128xf32>
    %36 = arith.addf %35, %34 : vector<8x128xf32>
    %37 = arith.divf %35, %36 : vector<8x128xf32>
    %38 = math.tanh %32 : vector<8x128xf32>
    %39 = vector.extract_strided_slice %37 {offsets = [0, 0], sizes = [8, 32], strides = [1, 1]} : vector<8x128xf32> to vector<8x32xf32>
    %40 = vector.extract_strided_slice %37 {offsets = [0, 32], sizes = [8, 32], strides = [1, 1]} : vector<8x128xf32> to vector<8x32xf32>
    %41 = vector.extract_strided_slice %38 {offsets = [0, 64], sizes = [8, 32], strides = [1, 1]} : vector<8x128xf32> to vector<8x32xf32>
    %42 = vector.extract_strided_slice %37 {offsets = [0, 96], sizes = [8, 32], strides = [1, 1]} : vector<8x128xf32> to vector<8x32xf32>
    %43 = arith.mulf %40, %25 : vector<8x32xf32>
    %44 = arith.mulf %39, %41 : vector<8x32xf32>
    %45 = arith.addf %43, %44 : vector<8x32xf32>
    %46 = math.tanh %45 : vector<8x32xf32>
    %47 = arith.mulf %42, %46 : vector<8x32xf32>
    %c2_i32 = arith.constant 2 : i32
    %48 = arith.index_cast %c2_i32 : i32 to index
    %c0_20 = arith.constant 0 : index
    %c0_21 = arith.constant 0 : index
    %49 = vector.load %arg6[%48, %c0_20, %c0_21] : memref<8x8x128xf32, #tpu.memory_space<vmem>>, vector<1x8x128xf32>
    %50 = vector.shape_cast %49 : vector<1x8x128xf32> to vector<8x128xf32>
    %cst_22 = arith.constant dense<0.000000e+00> : vector<8x128xf32>
    %51 = tpu.matmul %47, %9, %cst_22 {dimension_numbers = #tpu.dot_dimension_numbers<[1], [0], [0], [1], [0, 0, 1, 1], [], []>} : vector<8x32xf32>, vector<32x128xf32>, vector<8x128xf32> -> vector<8x128xf32>
    %52 = arith.addf %50, %51 : vector<8x128xf32>
    %53 = arith.negf %52 : vector<8x128xf32>
    %54 = math.exp %53 : vector<8x128xf32>
    %cst_23 = arith.constant 1.000000e+00 : f32
    %55 = vector.broadcast %cst_23 : f32 to vector<8x128xf32>
    %56 = arith.addf %55, %54 : vector<8x128xf32>
    %57 = arith.divf %55, %56 : vector<8x128xf32>
    %58 = math.tanh %52 : vector<8x128xf32>
    %59 = vector.extract_strided_slice %57 {offsets = [0, 0], sizes = [8, 32], strides = [1, 1]} : vector<8x128xf32> to vector<8x32xf32>
    %60 = vector.extract_strided_slice %57 {offsets = [0, 32], sizes = [8, 32], strides = [1, 1]} : vector<8x128xf32> to vector<8x32xf32>
    %61 = vector.extract_strided_slice %58 {offsets = [0, 64], sizes = [8, 32], strides = [1, 1]} : vector<8x128xf32> to vector<8x32xf32>
    %62 = vector.extract_strided_slice %57 {offsets = [0, 96], sizes = [8, 32], strides = [1, 1]} : vector<8x128xf32> to vector<8x32xf32>
    %63 = arith.mulf %60, %45 : vector<8x32xf32>
    %64 = arith.mulf %59, %61 : vector<8x32xf32>
    %65 = arith.addf %63, %64 : vector<8x32xf32>
    %66 = math.tanh %65 : vector<8x32xf32>
    %67 = arith.mulf %62, %66 : vector<8x32xf32>
    %c3_i32 = arith.constant 3 : i32
    %68 = arith.index_cast %c3_i32 : i32 to index
    %c0_24 = arith.constant 0 : index
    %c0_25 = arith.constant 0 : index
    %69 = vector.load %arg6[%68, %c0_24, %c0_25] : memref<8x8x128xf32, #tpu.memory_space<vmem>>, vector<1x8x128xf32>
    %70 = vector.shape_cast %69 : vector<1x8x128xf32> to vector<8x128xf32>
    %cst_26 = arith.constant dense<0.000000e+00> : vector<8x128xf32>
    %71 = tpu.matmul %67, %9, %cst_26 {dimension_numbers = #tpu.dot_dimension_numbers<[1], [0], [0], [1], [0, 0, 1, 1], [], []>} : vector<8x32xf32>, vector<32x128xf32>, vector<8x128xf32> -> vector<8x128xf32>
    %72 = arith.addf %70, %71 : vector<8x128xf32>
    %73 = arith.negf %72 : vector<8x128xf32>
    %74 = math.exp %73 : vector<8x128xf32>
    %cst_27 = arith.constant 1.000000e+00 : f32
    %75 = vector.broadcast %cst_27 : f32 to vector<8x128xf32>
    %76 = arith.addf %75, %74 : vector<8x128xf32>
    %77 = arith.divf %75, %76 : vector<8x128xf32>
    %78 = math.tanh %72 : vector<8x128xf32>
    %79 = vector.extract_strided_slice %77 {offsets = [0, 0], sizes = [8, 32], strides = [1, 1]} : vector<8x128xf32> to vector<8x32xf32>
    %80 = vector.extract_strided_slice %77 {offsets = [0, 32], sizes = [8, 32], strides = [1, 1]} : vector<8x128xf32> to vector<8x32xf32>
    %81 = vector.extract_strided_slice %78 {offsets = [0, 64], sizes = [8, 32], strides = [1, 1]} : vector<8x128xf32> to vector<8x32xf32>
    %82 = vector.extract_strided_slice %77 {offsets = [0, 96], sizes = [8, 32], strides = [1, 1]} : vector<8x128xf32> to vector<8x32xf32>
    %83 = arith.mulf %80, %65 : vector<8x32xf32>
    %84 = arith.mulf %79, %81 : vector<8x32xf32>
    %85 = arith.addf %83, %84 : vector<8x32xf32>
    %86 = math.tanh %85 : vector<8x32xf32>
    %87 = arith.mulf %82, %86 : vector<8x32xf32>
    %c4_i32 = arith.constant 4 : i32
    %88 = arith.index_cast %c4_i32 : i32 to index
    %c0_28 = arith.constant 0 : index
    %c0_29 = arith.constant 0 : index
    %89 = vector.load %arg6[%88, %c0_28, %c0_29] : memref<8x8x128xf32, #tpu.memory_space<vmem>>, vector<1x8x128xf32>
    %90 = vector.shape_cast %89 : vector<1x8x128xf32> to vector<8x128xf32>
    %cst_30 = arith.constant dense<0.000000e+00> : vector<8x128xf32>
    %91 = tpu.matmul %87, %9, %cst_30 {dimension_numbers = #tpu.dot_dimension_numbers<[1], [0], [0], [1], [0, 0, 1, 1], [], []>} : vector<8x32xf32>, vector<32x128xf32>, vector<8x128xf32> -> vector<8x128xf32>
    %92 = arith.addf %90, %91 : vector<8x128xf32>
    %93 = arith.negf %92 : vector<8x128xf32>
    %94 = math.exp %93 : vector<8x128xf32>
    %cst_31 = arith.constant 1.000000e+00 : f32
    %95 = vector.broadcast %cst_31 : f32 to vector<8x128xf32>
    %96 = arith.addf %95, %94 : vector<8x128xf32>
    %97 = arith.divf %95, %96 : vector<8x128xf32>
    %98 = math.tanh %92 : vector<8x128xf32>
    %99 = vector.extract_strided_slice %97 {offsets = [0, 0], sizes = [8, 32], strides = [1, 1]} : vector<8x128xf32> to vector<8x32xf32>
    %100 = vector.extract_strided_slice %97 {offsets = [0, 32], sizes = [8, 32], strides = [1, 1]} : vector<8x128xf32> to vector<8x32xf32>
    %101 = vector.extract_strided_slice %98 {offsets = [0, 64], sizes = [8, 32], strides = [1, 1]} : vector<8x128xf32> to vector<8x32xf32>
    %102 = vector.extract_strided_slice %97 {offsets = [0, 96], sizes = [8, 32], strides = [1, 1]} : vector<8x128xf32> to vector<8x32xf32>
    %103 = arith.mulf %100, %85 : vector<8x32xf32>
    %104 = arith.mulf %99, %101 : vector<8x32xf32>
    %105 = arith.addf %103, %104 : vector<8x32xf32>
    %106 = math.tanh %105 : vector<8x32xf32>
    %107 = arith.mulf %102, %106 : vector<8x32xf32>
    %c5_i32 = arith.constant 5 : i32
    %108 = arith.index_cast %c5_i32 : i32 to index
    %c0_32 = arith.constant 0 : index
    %c0_33 = arith.constant 0 : index
    %109 = vector.load %arg6[%108, %c0_32, %c0_33] : memref<8x8x128xf32, #tpu.memory_space<vmem>>, vector<1x8x128xf32>
    %110 = vector.shape_cast %109 : vector<1x8x128xf32> to vector<8x128xf32>
    %cst_34 = arith.constant dense<0.000000e+00> : vector<8x128xf32>
    %111 = tpu.matmul %107, %9, %cst_34 {dimension_numbers = #tpu.dot_dimension_numbers<[1], [0], [0], [1], [0, 0, 1, 1], [], []>} : vector<8x32xf32>, vector<32x128xf32>, vector<8x128xf32> -> vector<8x128xf32>
    %112 = arith.addf %110, %111 : vector<8x128xf32>
    %113 = arith.negf %112 : vector<8x128xf32>
    %114 = math.exp %113 : vector<8x128xf32>
    %cst_35 = arith.constant 1.000000e+00 : f32
    %115 = vector.broadcast %cst_35 : f32 to vector<8x128xf32>
    %116 = arith.addf %115, %114 : vector<8x128xf32>
    %117 = arith.divf %115, %116 : vector<8x128xf32>
    %118 = math.tanh %112 : vector<8x128xf32>
    %119 = vector.extract_strided_slice %117 {offsets = [0, 0], sizes = [8, 32], strides = [1, 1]} : vector<8x128xf32> to vector<8x32xf32>
    %120 = vector.extract_strided_slice %117 {offsets = [0, 32], sizes = [8, 32], strides = [1, 1]} : vector<8x128xf32> to vector<8x32xf32>
    %121 = vector.extract_strided_slice %118 {offsets = [0, 64], sizes = [8, 32], strides = [1, 1]} : vector<8x128xf32> to vector<8x32xf32>
    %122 = vector.extract_strided_slice %117 {offsets = [0, 96], sizes = [8, 32], strides = [1, 1]} : vector<8x128xf32> to vector<8x32xf32>
    %123 = arith.mulf %120, %105 : vector<8x32xf32>
    %124 = arith.mulf %119, %121 : vector<8x32xf32>
    %125 = arith.addf %123, %124 : vector<8x32xf32>
    %126 = math.tanh %125 : vector<8x32xf32>
    %127 = arith.mulf %122, %126 : vector<8x32xf32>
    %c6_i32 = arith.constant 6 : i32
    %128 = arith.index_cast %c6_i32 : i32 to index
    %c0_36 = arith.constant 0 : index
    %c0_37 = arith.constant 0 : index
    %129 = vector.load %arg6[%128, %c0_36, %c0_37] : memref<8x8x128xf32, #tpu.memory_space<vmem>>, vector<1x8x128xf32>
    %130 = vector.shape_cast %129 : vector<1x8x128xf32> to vector<8x128xf32>
    %cst_38 = arith.constant dense<0.000000e+00> : vector<8x128xf32>
    %131 = tpu.matmul %127, %9, %cst_38 {dimension_numbers = #tpu.dot_dimension_numbers<[1], [0], [0], [1], [0, 0, 1, 1], [], []>} : vector<8x32xf32>, vector<32x128xf32>, vector<8x128xf32> -> vector<8x128xf32>
    %132 = arith.addf %130, %131 : vector<8x128xf32>
    %133 = arith.negf %132 : vector<8x128xf32>
    %134 = math.exp %133 : vector<8x128xf32>
    %cst_39 = arith.constant 1.000000e+00 : f32
    %135 = vector.broadcast %cst_39 : f32 to vector<8x128xf32>
    %136 = arith.addf %135, %134 : vector<8x128xf32>
    %137 = arith.divf %135, %136 : vector<8x128xf32>
    %138 = math.tanh %132 : vector<8x128xf32>
    %139 = vector.extract_strided_slice %137 {offsets = [0, 0], sizes = [8, 32], strides = [1, 1]} : vector<8x128xf32> to vector<8x32xf32>
    %140 = vector.extract_strided_slice %137 {offsets = [0, 32], sizes = [8, 32], strides = [1, 1]} : vector<8x128xf32> to vector<8x32xf32>
    %141 = vector.extract_strided_slice %138 {offsets = [0, 64], sizes = [8, 32], strides = [1, 1]} : vector<8x128xf32> to vector<8x32xf32>
    %142 = vector.extract_strided_slice %137 {offsets = [0, 96], sizes = [8, 32], strides = [1, 1]} : vector<8x128xf32> to vector<8x32xf32>
    %143 = arith.mulf %140, %125 : vector<8x32xf32>
    %144 = arith.mulf %139, %141 : vector<8x32xf32>
    %145 = arith.addf %143, %144 : vector<8x32xf32>
    %146 = math.tanh %145 : vector<8x32xf32>
    %147 = arith.mulf %142, %146 : vector<8x32xf32>
    %c7_i32 = arith.constant 7 : i32
    %148 = arith.index_cast %c7_i32 : i32 to index
    %c0_40 = arith.constant 0 : index
    %c0_41 = arith.constant 0 : index
    %149 = vector.load %arg6[%148, %c0_40, %c0_41] : memref<8x8x128xf32, #tpu.memory_space<vmem>>, vector<1x8x128xf32>
    %150 = vector.shape_cast %149 : vector<1x8x128xf32> to vector<8x128xf32>
    %cst_42 = arith.constant dense<0.000000e+00> : vector<8x128xf32>
    %151 = tpu.matmul %147, %9, %cst_42 {dimension_numbers = #tpu.dot_dimension_numbers<[1], [0], [0], [1], [0, 0, 1, 1], [], []>} : vector<8x32xf32>, vector<32x128xf32>, vector<8x128xf32> -> vector<8x128xf32>
    %152 = arith.addf %150, %151 : vector<8x128xf32>
    %153 = arith.negf %152 : vector<8x128xf32>
    %154 = math.exp %153 : vector<8x128xf32>
    %cst_43 = arith.constant 1.000000e+00 : f32
    %155 = vector.broadcast %cst_43 : f32 to vector<8x128xf32>
    %156 = arith.addf %155, %154 : vector<8x128xf32>
    %157 = arith.divf %155, %156 : vector<8x128xf32>
    %158 = math.tanh %152 : vector<8x128xf32>
    %159 = vector.extract_strided_slice %157 {offsets = [0, 0], sizes = [8, 32], strides = [1, 1]} : vector<8x128xf32> to vector<8x32xf32>
    %160 = vector.extract_strided_slice %157 {offsets = [0, 32], sizes = [8, 32], strides = [1, 1]} : vector<8x128xf32> to vector<8x32xf32>
    %161 = vector.extract_strided_slice %158 {offsets = [0, 64], sizes = [8, 32], strides = [1, 1]} : vector<8x128xf32> to vector<8x32xf32>
    %162 = vector.extract_strided_slice %157 {offsets = [0, 96], sizes = [8, 32], strides = [1, 1]} : vector<8x128xf32> to vector<8x32xf32>
    %163 = arith.mulf %160, %145 : vector<8x32xf32>
    %164 = arith.mulf %159, %161 : vector<8x32xf32>
    %165 = arith.addf %163, %164 : vector<8x32xf32>
    %166 = math.tanh %165 : vector<8x32xf32>
    %167 = arith.mulf %162, %166 : vector<8x32xf32>
    %c7_i32_44 = arith.constant 7 : i32
    %c0_45 = arith.constant 0 : index
    %c0_46 = arith.constant 0 : index
    %168 = vector.load %arg5[%c0_45, %c0_46] : memref<8x32xf32, #tpu.memory_space<vmem>>, vector<8x32xf32>
    tpu.vector_store %arg5[%c0_45, %c0_46], %167 {strides = array<i32>} : memref<8x32xf32, #tpu.memory_space<vmem>>, vector<8x32xf32>,
    return
  }
  func.func @transform_0(%arg0: i32) -> (i32, i32, i32) {
    %c0_i32 = arith.constant 0 : i32
    %c0_i32_0 = arith.constant 0 : i32
    %c0_i32_1 = arith.constant 0 : i32
    return %c0_i32, %arg0, %c0_i32_0 : i32, i32, i32
  }
  func.func @transform_1(%arg0: i32) -> (i32, i32) {
    %c0_i32 = arith.constant 0 : i32
    %c0_i32_0 = arith.constant 0 : i32
    %c0_i32_1 = arith.constant 0 : i32
    return %c0_i32, %c0_i32_0 : i32, i32
  }
  func.func @transform_2(%arg0: i32) -> (i32, i32) {
    %c0_i32 = arith.constant 0 : i32
    %c0_i32_0 = arith.constant 0 : i32
    %c0_i32_1 = arith.constant 0 : i32
    return %c0_i32, %c0_i32_0 : i32, i32
  }
  func.func @transform_3(%arg0: i32) -> (i32, i32) {
    %c0_i32 = arith.constant 0 : i32
    %c0_i32_0 = arith.constant 0 : i32
    %c0_i32_1 = arith.constant 0 : i32
    return %c0_i32, %c0_i32_0 : i32, i32
  }
  func.func @transform_4(%arg0: i32) -> (i32, i32) {
    %c0_i32 = arith.constant 0 : i32
    %c0_i32_0 = arith.constant 0 : i32
    return %arg0, %c0_i32 : i32, i32
  }
}

</mosaic_0001>

<llo_original>
// kernel: _lambda_.1
$region0: #{_lambda_.1}
  #allocation0 [shape = 'u32[]', space=smem, size = 0x4, offset = 0x4, fixed_abs, tag = 'smem constant byte address 0x4 - core index']
  #allocation1 [shape = 'u32[144,128]{1,0:T(1,128)}', space=vmem, size = 0x12000, scoped, tag = 'internal scratch']
  #allocation2 [shape = 'f32[8,8,128]{2,1,0:T(8,128)}', space=vmem, size = 0x8000, scoped, tag = 'scratch operand']
  %s0 = inlined_call_operand.vmem [shape: f32[8,8,16], index: 0, kind: input, shape index: {}]
  %s1 = inlined_call_operand.vmem [shape: f32[16,128], index: 1, kind: input, shape index: {}]
  %s2 = inlined_call_operand.vmem [shape: f32[32,128], index: 2, kind: input, shape index: {}]
  %s3 = inlined_call_operand.vmem [shape: f32[1,128], index: 3, kind: input, shape index: {}]
  %s4 = inlined_call_operand.vmem [shape: f32[8,32], index: 4, kind: output, shape index: {}]
  %s5 = sld [smem:[#allocation0]]
  $region26: #{_lambda_.1} parent=0
    _
  %s7 = ssub.s32 1, %s5
  %s8 = scalar_select 0, %s7, %s5
  // Predicated region
  $region2: #{_lambda_.1} parent=0 // pred_check
    _
  $region3: #{_lambda_.1} parent=0 // pred_check_branch
    %10 = sbr.rel (0) target = $region5
  $region4: #{_lambda_.1} parent=0 // pred_region
    _
  $region5: #{_lambda_.1} parent=0 // pred_fallthru
    _
  // Predicated region
  $region6: #{_lambda_.1} parent=0 // pred_check
    _
  $region7: #{_lambda_.1} parent=0 // pred_check_branch
    %12 = sbr.rel (0) target = $region9
  $region8: #{_lambda_.1} parent=0 // pred_region
    _
  $region9: #{_lambda_.1} parent=0 // pred_fallthru
    _
  // Predicated region
  $region10: #{_lambda_.1} parent=0 // pred_check
    _
  $region11: #{_lambda_.1} parent=0 // pred_check_branch
    %14 = sbr.rel (0) target = $region13
  $region12: #{_lambda_.1} parent=0 // pred_region
    _
  $region13: #{_lambda_.1} parent=0 // pred_fallthru
    _
  // Predicated region
  $region14: #{_lambda_.1} parent=0 // pred_check
    _
  $region15: #{_lambda_.1} parent=0 // pred_check_branch
    %16 = sbr.rel (0) target = $region17
  $region16: #{_lambda_.1} parent=0 // pred_region
    _
  $region17: #{_lambda_.1} parent=0 // pred_fallthru
    _
  %v17 = vld [vmem:[%s0] sm:$0xff]
  %v18 = vld [vmem:[%s0 + $0x8] sm:$0xff]
  %v19 = vld [vmem:[%s0 + $0x10] sm:$0xff]
  %v20 = vld [vmem:[%s0 + $0x18] sm:$0xff]
  %v21 = vld [vmem:[%s0 + $0x20] sm:$0xff]
  %v22 = vld [vmem:[%s0 + $0x28] sm:$0xff]
  %v23 = vld [vmem:[%s0 + $0x30] sm:$0xff]
  %v24 = vld [vmem:[%s0 + $0x38] sm:$0xff]
  %v25 = vld [vmem:[%s1] sm:$0xff]
  %v26 = vld [vmem:[%s1 + $0x8] sm:$0xff]
  %v27 = vld [vmem:[%s3] sm:$0x1]
  %v29 = vlaneseq
  %v30 = vshrl.u32 %v29, 7
  %v31 = vsub.s32 0, %v30
  %v32 = vrot.slane %v27, %v31
  %vm34 = vcmask 130048
  %v36 = vsel %vm34, %v17, 0
  %v39 = vsel %vm34, %v18, 0
  %v42 = vsel %vm34, %v19, 0
  %v45 = vsel %vm34, %v20, 0
  %v48 = vsel %vm34, %v21, 0
  %v51 = vsel %vm34, %v22, 0
  %v54 = vsel %vm34, %v23, 0
  %v57 = vsel %vm34, %v24, 0
  %59 = vmatprep.subr.mxu0 0.0
  %60 = vmatpush1.msra.mxu0 0.0
  %61 = vmatprep.subr.mxu0 0.0
  %62 = vmatpush1.msra.mxu0 0.0
  %63 = vmatprep.subr.mxu0 0.0
  %64 = vmatpush1.msra.mxu0 0.0
  %65 = vmatprep.subr.mxu0 0.0
  %66 = vmatpush1.msra.mxu0 0.0
  %67 = vmatprep.subr.mxu0 0.0
  %68 = vmatpush1.msra.mxu0 0.0
  %69 = vmatprep.subr.mxu0 0.0
  %70 = vmatpush1.msra.mxu0 0.0
  %71 = vmatprep.subr.mxu0 0.0
  %72 = vmatpush1.msra.mxu0 0.0
  %73 = vmatprep.subr.mxu0 0.0
  %74 = vmatpush1.msra.mxu0 0.0
  %75 = vmatprep.subr.mxu0 0.0
  %76 = vmatpush1.msra.mxu0 0.0
  %77 = vmatprep.subr.mxu0 0.0
  %78 = vmatpush1.msra.mxu0 0.0
  %79 = vmatprep.subr.mxu0 0.0
  %80 = vmatpush1.msra.mxu0 0.0
  %81 = vmatprep.subr.mxu0 0.0
  %82 = vmatpush1.msra.mxu0 0.0
  %83 = vmatprep.subr.mxu0 0.0
  %84 = vmatpush1.msra.mxu0 0.0
  %85 = vmatprep.subr.mxu0 0.0
  %86 = vmatpush1.msra.mxu0 0.0
  %87 = vmatprep.subr.mxu0 0.0
  %88 = vmatpush1.msra.mxu0 %v26
  %89 = vmatprep.subr.mxu0 0.0
  %90 = vmatpush1.msra.mxu0 %v25
  %91 = vmatprep.subr.mxu0 0.0
  %92 = vmatpush2.msra.mxu0 0.0
  %93 = vmatprep.subr.mxu0 0.0
  %94 = vmatpush2.msra.mxu0 0.0
  %95 = vmatprep.subr.mxu0 0.0
  %96 = vmatpush2.msra.mxu0 0.0
  %97 = vmatprep.subr.mxu0 0.0
  %98 = vmatpush2.msra.mxu0 0.0
  %99 = vmatprep.subr.mxu0 0.0
  %100 = vmatpush2.msra.mxu0 0.0
  %101 = vmatprep.subr.mxu0 0.0
  %102 = vmatpush2.msra.mxu0 0.0
  %103 = vmatprep.subr.mxu0 0.0
  %104 = vmatpush2.msra.mxu0 0.0
  %105 = vmatprep.subr.mxu0 0.0
  %106 = vmatpush2.msra.mxu0 0.0
  %107 = vmatprep.subr.mxu0 0.0
  %108 = vmatpush2.msra.mxu0 0.0
  %109 = vmatprep.subr.mxu0 0.0
  %110 = vmatpush2.msra.mxu0 0.0
  %111 = vmatprep.subr.mxu0 0.0
  %112 = vmatpush2.msra.mxu0 0.0
  %113 = vmatprep.subr.mxu0 0.0
  %114 = vmatpush2.msra.mxu0 0.0
  %115 = vmatprep.subr.mxu0 0.0
  %116 = vmatpush2.msra.mxu0 0.0
  %117 = vmatprep.subr.mxu0 0.0
  %118 = vmatpush2.msra.mxu0 0.0
  %119 = vmatprep.subr.mxu0 0.0
  %120 = vmatpush2.msra.mxu0 0.0
  %121 = vmatprep.subr.mxu0 0.0
  %122 = vmatpush2.msra.mxu0 0.0
  %123 = vmatprep.mubr.f32.mxu0 0.0
  %124 = vmatmul.mubr.f32.gmra.mxu0 %v36
  %v125 = vpop.f32.mrf.mxu0
  %v126 = vadd.f32 %v32, %v125
  %v127 = vpop.f32.mrf.mxu0
  %128 = vmatprep.mubr.f32.mxu0 0.0
  %129 = vmatmul.mubr.f32.gmra.mxu0 %v39
  %v130 = vpop.f32.mrf.mxu0
  %v131 = vadd.f32 %v32, %v130
  %v132 = vpop.f32.mrf.mxu0
  %133 = vmatprep.mubr.f32.mxu0 0.0
  %134 = vmatmul.mubr.f32.gmra.mxu0 %v42
  %v135 = vpop.f32.mrf.mxu0
  %v136 = vadd.f32 %v32, %v135
  %v137 = vpop.f32.mrf.mxu0
  %138 = vmatprep.mubr.f32.mxu0 0.0
  %139 = vmatmul.mubr.f32.gmra.mxu0 %v45
  %v140 = vpop.f32.mrf.mxu0
  %v141 = vadd.f32 %v32, %v140
  %v142 = vpop.f32.mrf.mxu0
  %143 = vmatprep.mubr.f32.mxu0 0.0
  %144 = vmatmul.mubr.f32.gmra.mxu0 %v48
  %v145 = vpop.f32.mrf.mxu0
  %v146 = vadd.f32 %v32, %v145
  %v147 = vpop.f32.mrf.mxu0
  %148 = vmatprep.mubr.f32.mxu0 0.0
  %149 = vmatmul.mubr.f32.gmra.mxu0 %v51
  %v150 = vpop.f32.mrf.mxu0
  %v151 = vadd.f32 %v32, %v150
  %v152 = vpop.f32.mrf.mxu0
  %153 = vmatprep.mubr.f32.mxu0 0.0
  %154 = vmatmul.mubr.f32.gmra.mxu0 %v54
  %v155 = vpop.f32.mrf.mxu0
  %v156 = vadd.f32 %v32, %v155
  %v157 = vpop.f32.mrf.mxu0
  %158 = vmatprep.mubr.f32.mxu0 0.0
  %159 = vmatmul.mubr.f32.gmra.mxu0 %v57
  %v160 = vpop.f32.mrf.mxu0
  %v161 = vadd.f32 %v32, %v160
  %v162 = vpop.f32.mrf.mxu0
  %163 = vdwg.mxu0
  %164 = vst [vmem:[#allocation2] sm:$0xff] %v126
  %165 = vst [vmem:[#allocation2 + $0x8] sm:$0xff] %v131
  %166 = vst [vmem:[#allocation2 + $0x10] sm:$0xff] %v136
  %167 = vst [vmem:[#allocation2 + $0x18] sm:$0xff] %v141
  %168 = vst [vmem:[#allocation2 + $0x20] sm:$0xff] %v146
  %169 = vst [vmem:[#allocation2 + $0x28] sm:$0xff] %v151
  %170 = vst [vmem:[#allocation2 + $0x30] sm:$0xff] %v156
  %171 = vst [vmem:[#allocation2 + $0x38] sm:$0xff] %v161
  %v172 = vld [vmem:[%s2] sm:$0xff]
  %v173 = vld [vmem:[%s2 + $0x8] sm:$0xff]
  %v174 = vld [vmem:[%s2 + $0x10] sm:$0xff]
  %v175 = vld [vmem:[%s2 + $0x18] sm:$0xff]
  %v176 = vld [vmem:[#allocation2] sm:$0xff]
  %v177 = vxor.u32 %v176, 2147483648
  %v178 = vmul.f32 %v177, 1.442695
  %v179 = vpow.pop %v178
  %v180 = vadd.f32 %v179, 1.0
  %v181 = vrcp.pop %v180
  %v182 = vmul.f32 1.0, %v181
  %v183 = vtanh.pop %v176
  %v184 = vmul.f32 %v182, 0.0
  %186 = vrot.lane.b32.xlu0 %v183, 64
  %v187 = vpop.permute.xlu0 %186
  %v189 = vmul.f32 %v182, %v187
  %191 = vrot.lane.b32.xlu0 %v189, 32
  %v192 = vpop.permute.xlu0 %191
  %v194 = vadd.f32 %v184, %v192
  %v195 = vtanh.pop %v194
  %197 = vrot.lane.b32.xlu0 %v195, 64
  %v198 = vpop.permute.xlu0 %197
  %v200 = vmul.f32 %v182, %v198
  %s201 = scalar_lea.vmem [#allocation2], 8
  %v202 = vld [vmem:[%s201] sm:$0xff]
  %204 = vrot.lane.b32.xlu0 %v200, 32
  %v205 = vpop.permute.xlu0 %204
  %vm206 = vcmask 261120
  %v207 = vsel %vm206, %v205, 0
  %209 = vmatprep.subr.mxu0 0.0
  %210 = vmatpush1.msra.mxu0 0.0
  %211 = vmatprep.subr.mxu0 0.0
  %212 = vmatpush1.msra.mxu0 0.0
  %213 = vmatprep.subr.mxu0 0.0
  %214 = vmatpush1.msra.mxu0 0.0
  %215 = vmatprep.subr.mxu0 0.0
  %216 = vmatpush1.msra.mxu0 0.0
  %217 = vmatprep.subr.mxu0 0.0
  %218 = vmatpush1.msra.mxu0 0.0
  %219 = vmatprep.subr.mxu0 0.0
  %220 = vmatpush1.msra.mxu0 0.0
  %221 = vmatprep.subr.mxu0 0.0
  %222 = vmatpush1.msra.mxu0 0.0
  %223 = vmatprep.subr.mxu0 0.0
  %224 = vmatpush1.msra.mxu0 0.0
  %225 = vmatprep.subr.mxu0 0.0
  %226 = vmatpush1.msra.mxu0 0.0
  %227 = vmatprep.subr.mxu0 0.0
  %228 = vmatpush1.msra.mxu0 0.0
  %229 = vmatprep.subr.mxu0 0.0
  %230 = vmatpush1.msra.mxu0 0.0
  %231 = vmatprep.subr.mxu0 0.0
  %232 = vmatpush1.msra.mxu0 0.0
  %233 = vmatprep.subr.mxu0 0.0
  %234 = vmatpush1.msra.mxu0 %v175
  %235 = vmatprep.subr.mxu0 0.0
  %236 = vmatpush1.msra.mxu0 %v174
  %237 = vmatprep.subr.mxu0 0.0
  %238 = vmatpush1.msra.mxu0 %v173
  %239 = vmatprep.subr.mxu0 0.0
  %240 = vmatpush1.msra.mxu0 %v172
  %241 = vmatprep.subr.mxu0 0.0
  %242 = vmatpush2.msra.mxu0 0.0
  %243 = vmatprep.subr.mxu0 0.0
  %244 = vmatpush2.msra.mxu0 0.0
  %245 = vmatprep.subr.mxu0 0.0
  %246 = vmatpush2.msra.mxu0 0.0
  %247 = vmatprep.subr.mxu0 0.0
  %248 = vmatpush2.msra.mxu0 0.0
  %249 = vmatprep.subr.mxu0 0.0
  %250 = vmatpush2.msra.mxu0 0.0
  %251 = vmatprep.subr.mxu0 0.0
  %252 = vmatpush2.msra.mxu0 0.0
  %253 = vmatprep.subr.mxu0 0.0
  %254 = vmatpush2.msra.mxu0 0.0
  %255 = vmatprep.subr.mxu0 0.0
  %256 = vmatpush2.msra.mxu0 0.0
  %257 = vmatprep.subr.mxu0 0.0
  %258 = vmatpush2.msra.mxu0 0.0
  %259 = vmatprep.subr.mxu0 0.0
  %260 = vmatpush2.msra.mxu0 0.0
  %261 = vmatprep.subr.mxu0 0.0
  %262 = vmatpush2.msra.mxu0 0.0
  %263 = vmatprep.subr.mxu0 0.0
  %264 = vmatpush2.msra.mxu0 0.0
  %265 = vmatprep.subr.mxu0 0.0
  %266 = vmatpush2.msra.mxu0 0.0
  %267 = vmatprep.subr.mxu0 0.0
  %268 = vmatpush2.msra.mxu0 0.0
  %269 = vmatprep.subr.mxu0 0.0
  %270 = vmatpush2.msra.mxu0 0.0
  %271 = vmatprep.subr.mxu0 0.0
  %272 = vmatpush2.msra.mxu0 0.0
  %273 = vmatprep.mubr.f32.mxu0 0.0
  %274 = vmatmul.mubr.f32.gmra.mxu0 %v207
  %v275 = vpop.f32.mrf.mxu0
  %v276 = vadd.f32 0.0, %v275
  %v277 = vpop.f32.mrf.mxu0
  %278 = vdwg.mxu0
  %v279 = vadd.f32 %v202, %v276
  %v280 = vxor.u32 %v279, 2147483648
  %v281 = vmul.f32 %v280, 1.442695
  %v282 = vpow.pop %v281
  %v283 = vadd.f32 %v282, 1.0
  %v284 = vrcp.pop %v283
  %v285 = vmul.f32 1.0, %v284
  %v286 = vtanh.pop %v279
  %v287 = vmul.f32 %v285, %v194
  %289 = vrot.lane.b32.xlu0 %v286, 64
  %v290 = vpop.permute.xlu0 %289
  %v292 = vmul.f32 %v285, %v290
  %294 = vrot.lane.b32.xlu0 %v292, 32
  %v295 = vpop.permute.xlu0 %294
  %v297 = vadd.f32 %v287, %v295
  %v298 = vtanh.pop %v297
  %300 = vrot.lane.b32.xlu0 %v298, 64
  %v301 = vpop.permute.xlu0 %300
  %v303 = vmul.f32 %v285, %v301
  %s304 = scalar_lea.vmem [#allocation2], 16
  %v305 = vld [vmem:[%s304] sm:$0xff]
  %307 = vrot.lane.b32.xlu0 %v303, 32
  %v308 = vpop.permute.xlu0 %307
  %v309 = vsel %vm206, %v308, 0
  %311 = vmatprep.subr.mxu0 0.0
  %312 = vmatpush1.msra.mxu0 0.0
  %313 = vmatprep.subr.mxu0 0.0
  %314 = vmatpush1.msra.mxu0 0.0
  %315 = vmatprep.subr.mxu0 0.0
  %316 = vmatpush1.msra.mxu0 0.0
  %317 = vmatprep.subr.mxu0 0.0
  %318 = vmatpush1.msra.mxu0 0.0
  %319 = vmatprep.subr.mxu0 0.0
  %320 = vmatpush1.msra.mxu0 0.0
  %321 = vmatprep.subr.mxu0 0.0
  %322 = vmatpush1.msra.mxu0 0.0
  %323 = vmatprep.subr.mxu0 0.0
  %324 = vmatpush1.msra.mxu0 0.0
  %325 = vmatprep.subr.mxu0 0.0
  %326 = vmatpush1.msra.mxu0 0.0
  %327 = vmatprep.subr.mxu0 0.0
  %328 = vmatpush1.msra.mxu0 0.0
  %329 = vmatprep.subr.mxu0 0.0
  %330 = vmatpush1.msra.mxu0 0.0
  %331 = vmatprep.subr.mxu0 0.0
  %332 = vmatpush1.msra.mxu0 0.0
  %333 = vmatprep.subr.mxu0 0.0
  %334 = vmatpush1.msra.mxu0 0.0
  %335 = vmatprep.subr.mxu0 0.0
  %336 = vmatpush1.msra.mxu0 %v175
  %337 = vmatprep.subr.mxu0 0.0
  %338 = vmatpush1.msra.mxu0 %v174
  %339 = vmatprep.subr.mxu0 0.0
  %340 = vmatpush1.msra.mxu0 %v173
  %341 = vmatprep.subr.mxu0 0.0
  %342 = vmatpush1.msra.mxu0 %v172
  %343 = vmatprep.subr.mxu0 0.0
  %344 = vmatpush2.msra.mxu0 0.0
  %345 = vmatprep.subr.mxu0 0.0
  %346 = vmatpush2.msra.mxu0 0.0
  %347 = vmatprep.subr.mxu0 0.0
  %348 = vmatpush2.msra.mxu0 0.0
  %349 = vmatprep.subr.mxu0 0.0
  %350 = vmatpush2.msra.mxu0 0.0
  %351 = vmatprep.subr.mxu0 0.0
  %352 = vmatpush2.msra.mxu0 0.0
  %353 = vmatprep.subr.mxu0 0.0
  %354 = vmatpush2.msra.mxu0 0.0
  %355 = vmatprep.subr.mxu0 0.0
  %356 = vmatpush2.msra.mxu0 0.0
  %357 = vmatprep.subr.mxu0 0.0
  %358 = vmatpush2.msra.mxu0 0.0
  %359 = vmatprep.subr.mxu0 0.0
  %360 = vmatpush2.msra.mxu0 0.0
  %361 = vmatprep.subr.mxu0 0.0
  %362 = vmatpush2.msra.mxu0 0.0
  %363 = vmatprep.subr.mxu0 0.0
  %364 = vmatpush2.msra.mxu0 0.0
  %365 = vmatprep.subr.mxu0 0.0
  %366 = vmatpush2.msra.mxu0 0.0
  %367 = vmatprep.subr.mxu0 0.0
  %368 = vmatpush2.msra.mxu0 0.0
  %369 = vmatprep.subr.mxu0 0.0
  %370 = vmatpush2.msra.mxu0 0.0
  %371 = vmatprep.subr.mxu0 0.0
  %372 = vmatpush2.msra.mxu0 0.0
  %373 = vmatprep.subr.mxu0 0.0
  %374 = vmatpush2.msra.mxu0 0.0
  %375 = vmatprep.mubr.f32.mxu0 0.0
  %376 = vmatmul.mubr.f32.gmra.mxu0 %v309
  %v377 = vpop.f32.mrf.mxu0
  %v378 = vadd.f32 0.0, %v377
  %v379 = vpop.f32.mrf.mxu0
  %380 = vdwg.mxu0
  %v381 = vadd.f32 %v305, %v378
  %v382 = vxor.u32 %v381, 2147483648
  %v383 = vmul.f32 %v382, 1.442695
  %v384 = vpow.pop %v383
  %v385 = vadd.f32 %v384, 1.0
  %v386 = vrcp.pop %v385
  %v387 = vmul.f32 1.0, %v386
  %v388 = vtanh.pop %v381
  %v389 = vmul.f32 %v387, %v297
  %391 = vrot.lane.b32.xlu0 %v388, 64
  %v392 = vpop.permute.xlu0 %391
  %v394 = vmul.f32 %v387, %v392
  %396 = vrot.lane.b32.xlu0 %v394, 32
  %v397 = vpop.permute.xlu0 %396
  %v399 = vadd.f32 %v389, %v397
  %v400 = vtanh.pop %v399
  %402 = vrot.lane.b32.xlu0 %v400, 64
  %v403 = vpop.permute.xlu0 %402
  %v405 = vmul.f32 %v387, %v403
  %s406 = scalar_lea.vmem [#allocation2], 24
  %v407 = vld [vmem:[%s406] sm:$0xff]
  %409 = vrot.lane.b32.xlu0 %v405, 32
  %v410 = vpop.permute.xlu0 %409
  %v411 = vsel %vm206, %v410, 0
  %413 = vmatprep.subr.mxu0 0.0
  %414 = vmatpush1.msra.mxu0 0.0
  %415 = vmatprep.subr.mxu0 0.0
  %416 = vmatpush1.msra.mxu0 0.0
  %417 = vmatprep.subr.mxu0 0.0
  %418 = vmatpush1.msra.mxu0 0.0
  %419 = vmatprep.subr.mxu0 0.0
  %420 = vmatpush1.msra.mxu0 0.0
  %421 = vmatprep.subr.mxu0 0.0
  %422 = vmatpush1.msra.mxu0 0.0
  %423 = vmatprep.subr.mxu0 0.0
  %424 = vmatpush1.msra.mxu0 0.0
  %425 = vmatprep.subr.mxu0 0.0
  %426 = vmatpush1.msra.mxu0 0.0
  %427 = vmatprep.subr.mxu0 0.0
  %428 = vmatpush1.msra.mxu0 0.0
  %429 = vmatprep.subr.mxu0 0.0
  %430 = vmatpush1.msra.mxu0 0.0
  %431 = vmatprep.subr.mxu0 0.0
  %432 = vmatpush1.msra.mxu0 0.0
  %433 = vmatprep.subr.mxu0 0.0
  %434 = vmatpush1.msra.mxu0 0.0
  %435 = vmatprep.subr.mxu0 0.0
  %436 = vmatpush1.msra.mxu0 0.0
  %437 = vmatprep.subr.mxu0 0.0
  %438 = vmatpush1.msra.mxu0 %v175
  %439 = vmatprep.subr.mxu0 0.0
  %440 = vmatpush1.msra.mxu0 %v174
  %441 = vmatprep.subr.mxu0 0.0
  %442 = vmatpush1.msra.mxu0 %v173
  %443 = vmatprep.subr.mxu0 0.0
  %444 = vmatpush1.msra.mxu0 %v172
  %445 = vmatprep.subr.mxu0 0.0
  %446 = vmatpush2.msra.mxu0 0.0
  %447 = vmatprep.subr.mxu0 0.0
  %448 = vmatpush2.msra.mxu0 0.0
  %449 = vmatprep.subr.mxu0 0.0
  %450 = vmatpush2.msra.mxu0 0.0
  %451 = vmatprep.subr.mxu0 0.0
  %452 = vmatpush2.msra.mxu0 0.0
  %453 = vmatprep.subr.mxu0 0.0
  %454 = vmatpush2.msra.mxu0 0.0
  %455 = vmatprep.subr.mxu0 0.0
  %456 = vmatpush2.msra.mxu0 0.0
  %457 = vmatprep.subr.mxu0 0.0
  %458 = vmatpush2.msra.mxu0 0.0
  %459 = vmatprep.subr.mxu0 0.0
  %460 = vmatpush2.msra.mxu0 0.0
  %461 = vmatprep.subr.mxu0 0.0
  %462 = vmatpush2.msra.mxu0 0.0
  %463 = vmatprep.subr.mxu0 0.0
  %464 = vmatpush2.msra.mxu0 0.0
  %465 = vmatprep.subr.mxu0 0.0
  %466 = vmatpush2.msra.mxu0 0.0
  %467 = vmatprep.subr.mxu0 0.0
  %468 = vmatpush2.msra.mxu0 0.0
  %469 = vmatprep.subr.mxu0 0.0
  %470 = vmatpush2.msra.mxu0 0.0
  %471 = vmatprep.subr.mxu0 0.0
  %472 = vmatpush2.msra.mxu0 0.0
  %473 = vmatprep.subr.mxu0 0.0
  %474 = vmatpush2.msra.mxu0 0.0
  %475 = vmatprep.subr.mxu0 0.0
  %476 = vmatpush2.msra.mxu0 0.0
  %477 = vmatprep.mubr.f32.mxu0 0.0
  %478 = vmatmul.mubr.f32.gmra.mxu0 %v411
  %v479 = vpop.f32.mrf.mxu0
  %v480 = vadd.f32 0.0, %v479
  %v481 = vpop.f32.mrf.mxu0
  %482 = vdwg.mxu0
  %v483 = vadd.f32 %v407, %v480
  %v484 = vxor.u32 %v483, 2147483648
  %v485 = vmul.f32 %v484, 1.442695
  %v486 = vpow.pop %v485
  %v487 = vadd.f32 %v486, 1.0
  %v488 = vrcp.pop %v487
  %v489 = vmul.f32 1.0, %v488
  %v490 = vtanh.pop %v483
  %v491 = vmul.f32 %v489, %v399
  %493 = vrot.lane.b32.xlu0 %v490, 64
  %v494 = vpop.permute.xlu0 %493
  %v496 = vmul.f32 %v489, %v494
  %498 = vrot.lane.b32.xlu0 %v496, 32
  %v499 = vpop.permute.xlu0 %498
  %v501 = vadd.f32 %v491, %v499
  %v502 = vtanh.pop %v501
  %504 = vrot.lane.b32.xlu0 %v502, 64
  %v505 = vpop.permute.xlu0 %504
  %v507 = vmul.f32 %v489, %v505
  %s508 = scalar_lea.vmem [#allocation2], 32
  %v509 = vld [vmem:[%s508] sm:$0xff]
  %511 = vrot.lane.b32.xlu0 %v507, 32
  %v512 = vpop.permute.xlu0 %511
  %v513 = vsel %vm206, %v512, 0
  %515 = vmatprep.subr.mxu0 0.0
  %516 = vmatpush1.msra.mxu0 0.0
  %517 = vmatprep.subr.mxu0 0.0
  %518 = vmatpush1.msra.mxu0 0.0
  %519 = vmatprep.subr.mxu0 0.0
  %520 = vmatpush1.msra.mxu0 0.0
  %521 = vmatprep.subr.mxu0 0.0
  %522 = vmatpush1.msra.mxu0 0.0
  %523 = vmatprep.subr.mxu0 0.0
  %524 = vmatpush1.msra.mxu0 0.0
  %525 = vmatprep.subr.mxu0 0.0
  %526 = vmatpush1.msra.mxu0 0.0
  %527 = vmatprep.subr.mxu0 0.0
  %528 = vmatpush1.msra.mxu0 0.0
  %529 = vmatprep.subr.mxu0 0.0
  %530 = vmatpush1.msra.mxu0 0.0
  %531 = vmatprep.subr.mxu0 0.0
  %532 = vmatpush1.msra.mxu0 0.0
  %533 = vmatprep.subr.mxu0 0.0
  %534 = vmatpush1.msra.mxu0 0.0
  %535 = vmatprep.subr.mxu0 0.0
  %536 = vmatpush1.msra.mxu0 0.0
  %537 = vmatprep.subr.mxu0 0.0
  %538 = vmatpush1.msra.mxu0 0.0
  %539 = vmatprep.subr.mxu0 0.0
  %540 = vmatpush1.msra.mxu0 %v175
  %541 = vmatprep.subr.mxu0 0.0
  %542 = vmatpush1.msra.mxu0 %v174
  %543 = vmatprep.subr.mxu0 0.0
  %544 = vmatpush1.msra.mxu0 %v173
  %545 = vmatprep.subr.mxu0 0.0
  %546 = vmatpush1.msra.mxu0 %v172
  %547 = vmatprep.subr.mxu0 0.0
  %548 = vmatpush2.msra.mxu0 0.0
  %549 = vmatprep.subr.mxu0 0.0
  %550 = vmatpush2.msra.mxu0 0.0
  %551 = vmatprep.subr.mxu0 0.0
  %552 = vmatpush2.msra.mxu0 0.0
  %553 = vmatprep.subr.mxu0 0.0
  %554 = vmatpush2.msra.mxu0 0.0
  %555 = vmatprep.subr.mxu0 0.0
  %556 = vmatpush2.msra.mxu0 0.0
  %557 = vmatprep.subr.mxu0 0.0
  %558 = vmatpush2.msra.mxu0 0.0
  %559 = vmatprep.subr.mxu0 0.0
  %560 = vmatpush2.msra.mxu0 0.0
  %561 = vmatprep.subr.mxu0 0.0
  %562 = vmatpush2.msra.mxu0 0.0
  %563 = vmatprep.subr.mxu0 0.0
  %564 = vmatpush2.msra.mxu0 0.0
  %565 = vmatprep.subr.mxu0 0.0
  %566 = vmatpush2.msra.mxu0 0.0
  %567 = vmatprep.subr.mxu0 0.0
  %568 = vmatpush2.msra.mxu0 0.0
  %569 = vmatprep.subr.mxu0 0.0
  %570 = vmatpush2.msra.mxu0 0.0
  %571 = vmatprep.subr.mxu0 0.0
  %572 = vmatpush2.msra.mxu0 0.0
  %573 = vmatprep.subr.mxu0 0.0
  %574 = vmatpush2.msra.mxu0 0.0
  %575 = vmatprep.subr.mxu0 0.0
  %576 = vmatpush2.msra.mxu0 0.0
  %577 = vmatprep.subr.mxu0 0.0
  %578 = vmatpush2.msra.mxu0 0.0
  %579 = vmatprep.mubr.f32.mxu0 0.0
  %580 = vmatmul.mubr.f32.gmra.mxu0 %v513
  %v581 = vpop.f32.mrf.mxu0
  %v582 = vadd.f32 0.0, %v581
  %v583 = vpop.f32.mrf.mxu0
  %584 = vdwg.mxu0
  %v585 = vadd.f32 %v509, %v582
  %v586 = vxor.u32 %v585, 2147483648
  %v587 = vmul.f32 %v586, 1.442695
  %v588 = vpow.pop %v587
  %v589 = vadd.f32 %v588, 1.0
  %v590 = vrcp.pop %v589
  %v591 = vmul.f32 1.0, %v590
  %v592 = vtanh.pop %v585
  %v593 = vmul.f32 %v591, %v501
  %595 = vrot.lane.b32.xlu0 %v592, 64
  %v596 = vpop.permute.xlu0 %595
  %v598 = vmul.f32 %v591, %v596
  %600 = vrot.lane.b32.xlu0 %v598, 32
  %v601 = vpop.permute.xlu0 %600
  %v603 = vadd.f32 %v593, %v601
  %v604 = vtanh.pop %v603
  %606 = vrot.lane.b32.xlu0 %v604, 64
  %v607 = vpop.permute.xlu0 %606
  %v609 = vmul.f32 %v591, %v607
  %s610 = scalar_lea.vmem [#allocation2], 40
  %v611 = vld [vmem:[%s610] sm:$0xff]
  %613 = vrot.lane.b32.xlu0 %v609, 32
  %v614 = vpop.permute.xlu0 %613
  %v615 = vsel %vm206, %v614, 0
  %617 = vmatprep.subr.mxu0 0.0
  %618 = vmatpush1.msra.mxu0 0.0
  %619 = vmatprep.subr.mxu0 0.0
  %620 = vmatpush1.msra.mxu0 0.0
  %621 = vmatprep.subr.mxu0 0.0
  %622 = vmatpush1.msra.mxu0 0.0
  %623 = vmatprep.subr.mxu0 0.0
  %624 = vmatpush1.msra.mxu0 0.0
  %625 = vmatprep.subr.mxu0 0.0
  %626 = vmatpush1.msra.mxu0 0.0
  %627 = vmatprep.subr.mxu0 0.0
  %628 = vmatpush1.msra.mxu0 0.0
  %629 = vmatprep.subr.mxu0 0.0
  %630 = vmatpush1.msra.mxu0 0.0
  %631 = vmatprep.subr.mxu0 0.0
  %632 = vmatpush1.msra.mxu0 0.0
  %633 = vmatprep.subr.mxu0 0.0
  %634 = vmatpush1.msra.mxu0 0.0
  %635 = vmatprep.subr.mxu0 0.0
  %636 = vmatpush1.msra.mxu0 0.0
  %637 = vmatprep.subr.mxu0 0.0
  %638 = vmatpush1.msra.mxu0 0.0
  %639 = vmatprep.subr.mxu0 0.0
  %640 = vmatpush1.msra.mxu0 0.0
  %641 = vmatprep.subr.mxu0 0.0
  %642 = vmatpush1.msra.mxu0 %v175
  %643 = vmatprep.subr.mxu0 0.0
  %644 = vmatpush1.msra.mxu0 %v174
  %645 = vmatprep.subr.mxu0 0.0
  %646 = vmatpush1.msra.mxu0 %v173
  %647 = vmatprep.subr.mxu0 0.0
  %648 = vmatpush1.msra.mxu0 %v172
  %649 = vmatprep.subr.mxu0 0.0
  %650 = vmatpush2.msra.mxu0 0.0
  %651 = vmatprep.subr.mxu0 0.0
  %652 = vmatpush2.msra.mxu0 0.0
  %653 = vmatprep.subr.mxu0 0.0
  %654 = vmatpush2.msra.mxu0 0.0
  %655 = vmatprep.subr.mxu0 0.0
  %656 = vmatpush2.msra.mxu0 0.0
  %657 = vmatprep.subr.mxu0 0.0
  %658 = vmatpush2.msra.mxu0 0.0
  %659 = vmatprep.subr.mxu0 0.0
  %660 = vmatpush2.msra.mxu0 0.0
  %661 = vmatprep.subr.mxu0 0.0
  %662 = vmatpush2.msra.mxu0 0.0
  %663 = vmatprep.subr.mxu0 0.0
  %664 = vmatpush2.msra.mxu0 0.0
  %665 = vmatprep.subr.mxu0 0.0
  %666 = vmatpush2.msra.mxu0 0.0
  %667 = vmatprep.subr.mxu0 0.0
  %668 = vmatpush2.msra.mxu0 0.0
  %669 = vmatprep.subr.mxu0 0.0
  %670 = vmatpush2.msra.mxu0 0.0
  %671 = vmatprep.subr.mxu0 0.0
  %672 = vmatpush2.msra.mxu0 0.0
  %673 = vmatprep.subr.mxu0 0.0
  %674 = vmatpush2.msra.mxu0 0.0
  %675 = vmatprep.subr.mxu0 0.0
  %676 = vmatpush2.msra.mxu0 0.0
  %677 = vmatprep.subr.mxu0 0.0
  %678 = vmatpush2.msra.mxu0 0.0
  %679 = vmatprep.subr.mxu0 0.0
  %680 = vmatpush2.msra.mxu0 0.0
  %681 = vmatprep.mubr.f32.mxu0 0.0
  %682 = vmatmul.mubr.f32.gmra.mxu0 %v615
  %v683 = vpop.f32.mrf.mxu0
  %v684 = vadd.f32 0.0, %v683
  %v685 = vpop.f32.mrf.mxu0
  %686 = vdwg.mxu0
  %v687 = vadd.f32 %v611, %v684
  %v688 = vxor.u32 %v687, 2147483648
  %v689 = vmul.f32 %v688, 1.442695
  %v690 = vpow.pop %v689
  %v691 = vadd.f32 %v690, 1.0
  %v692 = vrcp.pop %v691
  %v693 = vmul.f32 1.0, %v692
  %v694 = vtanh.pop %v687
  %v695 = vmul.f32 %v693, %v603
  %697 = vrot.lane.b32.xlu0 %v694, 64
  %v698 = vpop.permute.xlu0 %697
  %v700 = vmul.f32 %v693, %v698
  %702 = vrot.lane.b32.xlu0 %v700, 32
  %v703 = vpop.permute.xlu0 %702
  %v705 = vadd.f32 %v695, %v703
  %v706 = vtanh.pop %v705
  %708 = vrot.lane.b32.xlu0 %v706, 64
  %v709 = vpop.permute.xlu0 %708
  %v711 = vmul.f32 %v693, %v709
  %s712 = scalar_lea.vmem [#allocation2], 48
  %v713 = vld [vmem:[%s712] sm:$0xff]
  %715 = vrot.lane.b32.xlu0 %v711, 32
  %v716 = vpop.permute.xlu0 %715
  %v717 = vsel %vm206, %v716, 0
  %719 = vmatprep.subr.mxu0 0.0
  %720 = vmatpush1.msra.mxu0 0.0
  %721 = vmatprep.subr.mxu0 0.0
  %722 = vmatpush1.msra.mxu0 0.0
  %723 = vmatprep.subr.mxu0 0.0
  %724 = vmatpush1.msra.mxu0 0.0
  %725 = vmatprep.subr.mxu0 0.0
  %726 = vmatpush1.msra.mxu0 0.0
  %727 = vmatprep.subr.mxu0 0.0
  %728 = vmatpush1.msra.mxu0 0.0
  %729 = vmatprep.subr.mxu0 0.0
  %730 = vmatpush1.msra.mxu0 0.0
  %731 = vmatprep.subr.mxu0 0.0
  %732 = vmatpush1.msra.mxu0 0.0
  %733 = vmatprep.subr.mxu0 0.0
  %734 = vmatpush1.msra.mxu0 0.0
  %735 = vmatprep.subr.mxu0 0.0
  %736 = vmatpush1.msra.mxu0 0.0
  %737 = vmatprep.subr.mxu0 0.0
  %738 = vmatpush1.msra.mxu0 0.0
  %739 = vmatprep.subr.mxu0 0.0
  %740 = vmatpush1.msra.mxu0 0.0
  %741 = vmatprep.subr.mxu0 0.0
  %742 = vmatpush1.msra.mxu0 0.0
  %743 = vmatprep.subr.mxu0 0.0
  %744 = vmatpush1.msra.mxu0 %v175
  %745 = vmatprep.subr.mxu0 0.0
  %746 = vmatpush1.msra.mxu0 %v174
  %747 = vmatprep.subr.mxu0 0.0
  %748 = vmatpush1.msra.mxu0 %v173
  %749 = vmatprep.subr.mxu0 0.0
  %750 = vmatpush1.msra.mxu0 %v172
  %751 = vmatprep.subr.mxu0 0.0
  %752 = vmatpush2.msra.mxu0 0.0
  %753 = vmatprep.subr.mxu0 0.0
  %754 = vmatpush2.msra.mxu0 0.0
  %755 = vmatprep.subr.mxu0 0.0
  %756 = vmatpush2.msra.mxu0 0.0
  %757 = vmatprep.subr.mxu0 0.0
  %758 = vmatpush2.msra.mxu0 0.0
  %759 = vmatprep.subr.mxu0 0.0
  %760 = vmatpush2.msra.mxu0 0.0
  %761 = vmatprep.subr.mxu0 0.0
  %762 = vmatpush2.msra.mxu0 0.0
  %763 = vmatprep.subr.mxu0 0.0
  %764 = vmatpush2.msra.mxu0 0.0
  %765 = vmatprep.subr.mxu0 0.0
  %766 = vmatpush2.msra.mxu0 0.0
  %767 = vmatprep.subr.mxu0 0.0
  %768 = vmatpush2.msra.mxu0 0.0
  %769 = vmatprep.subr.mxu0 0.0
  %770 = vmatpush2.msra.mxu0 0.0
  %771 = vmatprep.subr.mxu0 0.0
  %772 = vmatpush2.msra.mxu0 0.0
  %773 = vmatprep.subr.mxu0 0.0
  %774 = vmatpush2.msra.mxu0 0.0
  %775 = vmatprep.subr.mxu0 0.0
  %776 = vmatpush2.msra.mxu0 0.0
  %777 = vmatprep.subr.mxu0 0.0
  %778 = vmatpush2.msra.mxu0 0.0
  %779 = vmatprep.subr.mxu0 0.0
  %780 = vmatpush2.msra.mxu0 0.0
  %781 = vmatprep.subr.mxu0 0.0
  %782 = vmatpush2.msra.mxu0 0.0
  %783 = vmatprep.mubr.f32.mxu0 0.0
  %784 = vmatmul.mubr.f32.gmra.mxu0 %v717
  %v785 = vpop.f32.mrf.mxu0
  %v786 = vadd.f32 0.0, %v785
  %v787 = vpop.f32.mrf.mxu0
  %788 = vdwg.mxu0
  %v789 = vadd.f32 %v713, %v786
  %v790 = vxor.u32 %v789, 2147483648
  %v791 = vmul.f32 %v790, 1.442695
  %v792 = vpow.pop %v791
  %v793 = vadd.f32 %v792, 1.0
  %v794 = vrcp.pop %v793
  %v795 = vmul.f32 1.0, %v794
  %v796 = vtanh.pop %v789
  %v797 = vmul.f32 %v795, %v705
  %799 = vrot.lane.b32.xlu0 %v796, 64
  %v800 = vpop.permute.xlu0 %799
  %v802 = vmul.f32 %v795, %v800
  %804 = vrot.lane.b32.xlu0 %v802, 32
  %v805 = vpop.permute.xlu0 %804
  %v807 = vadd.f32 %v797, %v805
  %v808 = vtanh.pop %v807
  %810 = vrot.lane.b32.xlu0 %v808, 64
  %v811 = vpop.permute.xlu0 %810
  %v813 = vmul.f32 %v795, %v811
  %s814 = scalar_lea.vmem [#allocation2], 56
  %v815 = vld [vmem:[%s814] sm:$0xff]
  %817 = vrot.lane.b32.xlu0 %v813, 32
  %v818 = vpop.permute.xlu0 %817
  %v819 = vsel %vm206, %v818, 0
  %821 = vmatprep.subr.mxu0 0.0
  %822 = vmatpush1.msra.mxu0 0.0
  %823 = vmatprep.subr.mxu0 0.0
  %824 = vmatpush1.msra.mxu0 0.0
  %825 = vmatprep.subr.mxu0 0.0
  %826 = vmatpush1.msra.mxu0 0.0
  %827 = vmatprep.subr.mxu0 0.0
  %828 = vmatpush1.msra.mxu0 0.0
  %829 = vmatprep.subr.mxu0 0.0
  %830 = vmatpush1.msra.mxu0 0.0
  %831 = vmatprep.subr.mxu0 0.0
  %832 = vmatpush1.msra.mxu0 0.0
  %833 = vmatprep.subr.mxu0 0.0
  %834 = vmatpush1.msra.mxu0 0.0
  %835 = vmatprep.subr.mxu0 0.0
  %836 = vmatpush1.msra.mxu0 0.0
  %837 = vmatprep.subr.mxu0 0.0
  %838 = vmatpush1.msra.mxu0 0.0
  %839 = vmatprep.subr.mxu0 0.0
  %840 = vmatpush1.msra.mxu0 0.0
  %841 = vmatprep.subr.mxu0 0.0
  %842 = vmatpush1.msra.mxu0 0.0
  %843 = vmatprep.subr.mxu0 0.0
  %844 = vmatpush1.msra.mxu0 0.0
  %845 = vmatprep.subr.mxu0 0.0
  %846 = vmatpush1.msra.mxu0 %v175
  %847 = vmatprep.subr.mxu0 0.0
  %848 = vmatpush1.msra.mxu0 %v174
  %849 = vmatprep.subr.mxu0 0.0
  %850 = vmatpush1.msra.mxu0 %v173
  %851 = vmatprep.subr.mxu0 0.0
  %852 = vmatpush1.msra.mxu0 %v172
  %853 = vmatprep.subr.mxu0 0.0
  %854 = vmatpush2.msra.mxu0 0.0
  %855 = vmatprep.subr.mxu0 0.0
  %856 = vmatpush2.msra.mxu0 0.0
  %857 = vmatprep.subr.mxu0 0.0
  %858 = vmatpush2.msra.mxu0 0.0
  %859 = vmatprep.subr.mxu0 0.0
  %860 = vmatpush2.msra.mxu0 0.0
  %861 = vmatprep.subr.mxu0 0.0
  %862 = vmatpush2.msra.mxu0 0.0
  %863 = vmatprep.subr.mxu0 0.0
  %864 = vmatpush2.msra.mxu0 0.0
  %865 = vmatprep.subr.mxu0 0.0
  %866 = vmatpush2.msra.mxu0 0.0
  %867 = vmatprep.subr.mxu0 0.0
  %868 = vmatpush2.msra.mxu0 0.0
  %869 = vmatprep.subr.mxu0 0.0
  %870 = vmatpush2.msra.mxu0 0.0
  %871 = vmatprep.subr.mxu0 0.0
  %872 = vmatpush2.msra.mxu0 0.0
  %873 = vmatprep.subr.mxu0 0.0
  %874 = vmatpush2.msra.mxu0 0.0
  %875 = vmatprep.subr.mxu0 0.0
  %876 = vmatpush2.msra.mxu0 0.0
  %877 = vmatprep.subr.mxu0 0.0
  %878 = vmatpush2.msra.mxu0 0.0
  %879 = vmatprep.subr.mxu0 0.0
  %880 = vmatpush2.msra.mxu0 0.0
  %881 = vmatprep.subr.mxu0 0.0
  %882 = vmatpush2.msra.mxu0 0.0
  %883 = vmatprep.subr.mxu0 0.0
  %884 = vmatpush2.msra.mxu0 0.0
  %885 = vmatprep.mubr.f32.mxu0 0.0
  %886 = vmatmul.mubr.f32.gmra.mxu0 %v819
  %v887 = vpop.f32.mrf.mxu0
  %v888 = vadd.f32 0.0, %v887
  %v889 = vpop.f32.mrf.mxu0
  %890 = vdwg.mxu0
  %v891 = vadd.f32 %v815, %v888
  %v892 = vxor.u32 %v891, 2147483648
  %v893 = vmul.f32 %v892, 1.442695
  %v894 = vpow.pop %v893
  %v895 = vadd.f32 %v894, 1.0
  %v896 = vrcp.pop %v895
  %v897 = vmul.f32 1.0, %v896
  %v898 = vtanh.pop %v891
  %v899 = vmul.f32 %v897, %v807
  %901 = vrot.lane.b32.xlu0 %v898, 64
  %v902 = vpop.permute.xlu0 %901
  %v904 = vmul.f32 %v897, %v902
  %906 = vrot.lane.b32.xlu0 %v904, 32
  %v907 = vpop.permute.xlu0 %906
  %v909 = vadd.f32 %v899, %v907
  %v910 = vtanh.pop %v909
  %912 = vrot.lane.b32.xlu0 %v910, 64
  %v913 = vpop.permute.xlu0 %912
  %v915 = vmul.f32 %v897, %v913
  %917 = vrot.lane.b32.xlu0 %v915, 32
  %v918 = vpop.permute.xlu0 %917
  %920 = vst.msk [vmem:[%s4] sm:$0xff] %vm206, %v918
  // Predicated region
  $region18: #{_lambda_.1} parent=0 // pred_check
    _
  $region19: #{_lambda_.1} parent=0 // pred_check_branch
    %922 = sbr.rel (0) target = $region21
  $region20: #{_lambda_.1} parent=0 // pred_region
    _
  $region21: #{_lambda_.1} parent=0 // pred_fallthru
    _
  // Predicated region
  $region22: #{_lambda_.1} parent=0 // pred_check
    _
  $region23: #{_lambda_.1} parent=0 // pred_check_branch
    %924 = sbr.rel (0) target = $region25
  $region24: #{_lambda_.1} parent=0 // pred_region
    _
  $region25: #{_lambda_.1} parent=0 // pred_fallthru
    _

</llo_original>
